<compile_context>
chip_gen: v7x
topology: tpu7x:2x2x1
jax: 0.10.0
libtpu: 0.0.40
codegen_flags: <defaults>
</compile_context>

<pallas_src>
import functools

import jax
import jax.numpy as jnp
from jax.experimental import pallas as pl
from jax.experimental.pallas import tpu as pltpu


GRAD_CLIP_X = 0.01


def _gs_loss_kernel(gt_rd_ref, pred_rd_ref, range_ref, pred_range_ref, out_ref,
                    *, inv_full, inv_grad):
    # Block refs are (1, TH, W); squeeze the leading batch-block axis.
    gt_rd = gt_rd_ref[0]          # (TH, W) f32
    pred_rd = pred_rd_ref[0]
    rng = range_ref[0]
    pred_rng = pred_range_ref[0]

    th, w = gt_rd.shape  # static block shape

    # Lane-validity mask: horizontal gradients exist for columns [0, W-2].
    col = jax.lax.broadcasted_iota(jnp.int32, (th, w), 1)
    valid = (col < (w - 1)).astype(jnp.float32)

    # --- dense (all-lane) terms: ray-drop MSE + masked depth L1 --------------
    rd_diff = gt_rd - pred_rd
    gt_depth = rng * gt_rd
    pred_depth = pred_rng * gt_rd
    dense = rd_diff * rd_diff + jnp.abs(pred_depth - gt_depth)

    # --- horizontal-gradient terms via XLU roll ------------------------------
    # roll by (w-1) == roll by -1: x_next[c] = x[c+1] for c < W-1 (column W-1
    # wraps around and is killed by `valid`).
    def nxt(x):
        return pltpu.roll(x, shift=w - 1, axis=1)

    gt_grad = jnp.abs(gt_depth - nxt(gt_depth))
    pred_grad = jnp.abs(pred_depth - nxt(pred_depth))
    gt_rd_grad = jnp.abs(gt_rd - nxt(gt_rd))
    pred_rd_grad = jnp.abs(pred_rd - nxt(pred_rd))

    # grad_mask/mask_dx are non-negative, so |p*m - g*m| == m*|p - g|.
    grad_mask = (gt_grad < GRAD_CLIP_X).astype(jnp.float32)
    mask_dx = gt_rd * grad_mask * valid
    grads = (mask_dx * jnp.abs(pred_grad - gt_grad)
             + valid * gt_rd_grad * jnp.abs(pred_rd_grad - 1.0))

    # One fused per-element contribution, pre-scaled so a single reduction and
    # a single accumulator suffice.
    partial = jnp.sum(dense * inv_full + grads * inv_grad)

    # Write this block's partial sum into element (0,0) of its private,
    # lane-aligned (8,128) output tile (everything else zero); the wrapper
    # sums all tiles.
    ridx = jax.lax.broadcasted_iota(jnp.int32, (8, 128), 0)
    cidx = jax.lax.broadcasted_iota(jnp.int32, (8, 128), 1)
    tile = ((ridx == 0) & (cidx == 0)).astype(jnp.float32) * partial
    out_ref[...] = tile.reshape(1, 1, 8, 128)


def _pick_row_tile(H, W, budget_bytes=12 * 1024 * 1024):
    """Largest H-tile (multiple of 8 dividing H) whose pipelined VMEM footprint
    (4 inputs x 2 buffers) stays within `budget_bytes` (safe on v5e/v7x)."""
    bytes_per_row = 4 * 2 * W * 4
    cap = max(8, (budget_bytes // bytes_per_row) // 8 * 8)
    if H <= cap:
        return H            # single H-tile (block == full dim, any H allowed)
    th = (cap // 8) * 8
    while th >= 8:
        if H % th == 0:
            return th
        th -= 8
    # TODO(synk): H > budget with no multiple-of-8 divisor -> fall back to the
    # whole H extent (may exceed the conservative VMEM budget).
    return H


def gaussian_loss(gt_ray_drop, pred_ray_drop, range_img, pred_range, *, row_tile=None):
    """Pallas implementation of GaussianLoss.forward.

    All four inputs share the same (B, H, W) shape. Returns a scalar f32 loss.
    """
    shape = gt_ray_drop.shape
    assert pred_ray_drop.shape == shape and range_img.shape == shape and pred_range.shape == shape
    B, H, W = shape
    assert W >= 2, "W must be >= 2 (horizontal gradient needs two columns)"

    TH = _pick_row_tile(H, W) if row_tile is None else int(row_tile)
    if H % TH != 0:
        raise ValueError(f"row_tile={TH} must divide H={H}")
    gh = H // TH

    inv_full = 1.0 / float(B * H * W)
    inv_grad = 1.0 / float(B * H * (W - 1))
    kernel = functools.partial(_gs_loss_kernel, inv_full=inv_full, inv_grad=inv_grad)

    # 4 inputs x 2 pipeline buffers per tile, plus generous headroom; clamp to
    # v7x's 64 MiB physical VMEM.
    footprint = 4 * 2 * TH * W * 4
    vmem_limit = int(min(64 * 1024 * 1024, max(16 * 1024 * 1024, 3 * footprint)))

    in_spec = pl.BlockSpec((1, TH, W), lambda b, h: (b, h, 0))
    partials = pl.pallas_call(
        kernel,
        out_shape=jax.ShapeDtypeStruct((B, gh, 8, 128), jnp.float32),
        grid=(B, gh),
        in_specs=[in_spec, in_spec, in_spec, in_spec],
        out_specs=pl.BlockSpec((1, 1, 8, 128), lambda b, h: (b, h, 0, 0)),
        compiler_params=pltpu.CompilerParams(
            dimension_semantics=("parallel", "parallel"),
            vmem_limit_bytes=vmem_limit,
        ),
    )(
        gt_ray_drop.astype(jnp.float32),
        pred_ray_drop.astype(jnp.float32),
        range_img.astype(jnp.float32),
        pred_range.astype(jnp.float32),
    )
    # Tiny final reduction over per-block partials (one non-zero per tile).
    return jnp.sum(partials)


def _reference_loss(gt_rd, pred_rd, range_img, pred_range):
    """Pure-JAX reference mirroring the PyTorch module exactly."""
    raydrop_loss = jnp.mean((gt_rd - pred_rd) ** 2)
    gt_depth = range_img * gt_rd
    pred_depth = pred_range * gt_rd
    depth_loss = jnp.mean(jnp.abs(pred_depth - gt_depth))
    pred_grad_x = jnp.abs(pred_depth[:, :, :-1] - pred_depth[:, :, 1:])
    gt_grad_x = jnp.abs(gt_depth[:, :, :-1] - gt_depth[:, :, 1:])
    grad_mask_x = jnp.where(gt_grad_x < GRAD_CLIP_X, 1.0, 0.0)
    mask_dx = gt_rd[:, :, :-1] * grad_mask_x
    grad_loss = jnp.mean(jnp.abs(pred_grad_x * mask_dx - gt_grad_x * mask_dx))
    pred_rd_grad_x = jnp.abs(pred_rd[:, :, :-1] - pred_rd[:, :, 1:])
    gt_rd_grad_x = jnp.abs(gt_rd[:, :, :-1] - gt_rd[:, :, 1:])
    raydrop_grad_loss = jnp.mean(jnp.abs(pred_rd_grad_x * gt_rd_grad_x - gt_rd_grad_x))
    return raydrop_loss + depth_loss + grad_loss + raydrop_grad_loss


if __name__ == "__main__":
    B, H, W = 2, 16, 256
    key = jax.random.PRNGKey(0)
    k1, k2, k3, k4 = jax.random.split(key, 4)

    # gt ray-drop is a binary mask; predictions / ranges are floats.
    gt_ray_drop = jax.random.bernoulli(k1, p=0.7, shape=(B, H, W)).astype(jnp.float32)
    pred_ray_drop = jax.random.uniform(k2, (B, H, W), dtype=jnp.float32)
    range_img = jax.random.uniform(k3, (B, H, W), dtype=jnp.float32) * 50.0
    pred_range = jax.random.uniform(k4, (B, H, W), dtype=jnp.float32) * 50.0

    ref = jax.block_until_ready(
        _reference_loss(gt_ray_drop, pred_ray_drop, range_img, pred_range)
    )

    # Auto-picked row tile (single H tile here) ...
    loss_auto = jax.block_until_ready(
        gaussian_loss(gt_ray_drop, pred_ray_drop, range_img, pred_range)
    )
    # ... and an explicit multi-tile grid to exercise the (2, 2) gridded path.
    loss_tiled = jax.block_until_ready(
        gaussian_loss(gt_ray_drop, pred_ray_drop, range_img, pred_range, row_tile=8)
    )

    assert jnp.allclose(loss_auto, ref, rtol=1e-4, atol=1e-4), (loss_auto, ref)
    assert jnp.allclose(loss_tiled, ref, rtol=1e-4, atol=1e-4), (loss_tiled, ref)

    print("KERNEL_OK")
</pallas_src>

<mosaic_0001>
module attributes {stable_mosaic.version = 11 : i64} {
  func.func @_gs_loss_kernel(%arg0: i32, %arg1: i32, %arg2: memref<1x16x256xf32, #tpu.memory_space<vmem>>, %arg3: memref<1x16x256xf32, #tpu.memory_space<vmem>>, %arg4: memref<1x16x256xf32, #tpu.memory_space<vmem>>, %arg5: memref<1x16x256xf32, #tpu.memory_space<vmem>>, %arg6: memref<1x1x8x128xf32, #tpu.memory_space<vmem>>) attributes {dimension_semantics = [#tpu.dimension_semantics<parallel>, #tpu.dimension_semantics<parallel>], iteration_bounds = array<i64: 2, 1>, scalar_prefetch = 0 : i64, scratch_operands = 0 : i64, tpu.core_type = #tpu.core_type<tc>, window_params = [{transform_indices = @transform_0, window_bounds = array<i64: 1, 16, 256>}, {transform_indices = @transform_1, window_bounds = array<i64: 1, 16, 256>}, {transform_indices = @transform_2, window_bounds = array<i64: 1, 16, 256>}, {transform_indices = @transform_3, window_bounds = array<i64: 1, 16, 256>}, {transform_indices = @transform_4, window_bounds = array<i64: 1, 1, 8, 128>}]} {
    %c0 = arith.constant 0 : index
    %c0_0 = arith.constant 0 : index
    %c0_1 = arith.constant 0 : index
    %0 = vector.load %arg2[%c0, %c0_0, %c0_1] : memref<1x16x256xf32, #tpu.memory_space<vmem>>, vector<1x16x256xf32>
    %1 = vector.shape_cast %0 : vector<1x16x256xf32> to vector<16x256xf32>
    %c0_2 = arith.constant 0 : index
    %c0_3 = arith.constant 0 : index
    %c0_4 = arith.constant 0 : index
    %2 = vector.load %arg3[%c0_2, %c0_3, %c0_4] : memref<1x16x256xf32, #tpu.memory_space<vmem>>, vector<1x16x256xf32>
    %3 = vector.shape_cast %2 : vector<1x16x256xf32> to vector<16x256xf32>
    %c0_5 = arith.constant 0 : index
    %c0_6 = arith.constant 0 : index
    %c0_7 = arith.constant 0 : index
    %4 = vector.load %arg4[%c0_5, %c0_6, %c0_7] : memref<1x16x256xf32, #tpu.memory_space<vmem>>, vector<1x16x256xf32>
    %5 = vector.shape_cast %4 : vector<1x16x256xf32> to vector<16x256xf32>
    %c0_8 = arith.constant 0 : index
    %c0_9 = arith.constant 0 : index
    %c0_10 = arith.constant 0 : index
    %6 = vector.load %arg5[%c0_8, %c0_9, %c0_10] : memref<1x16x256xf32, #tpu.memory_space<vmem>>, vector<1x16x256xf32>
    %7 = vector.shape_cast %6 : vector<1x16x256xf32> to vector<16x256xf32>
    %8 = tpu.iota {dimensions = array<i32: 1>} : vector<16x256xi32>
    %c255_i32 = arith.constant 255 : i32
    %9 = vector.broadcast %c255_i32 : i32 to vector<16x256xi32>
    %10 = arith.cmpi slt, %8, %9 : vector<16x256xi32>
    %11 = arith.extui %10 : vector<16x256xi1> to vector<16x256xi32>
    %12 = arith.sitofp %11 : vector<16x256xi32> to vector<16x256xf32>
    %13 = arith.subf %1, %3 : vector<16x256xf32>
    %14 = arith.mulf %5, %1 : vector<16x256xf32>
    %15 = arith.mulf %7, %1 : vector<16x256xf32>
    %16 = arith.mulf %13, %13 : vector<16x256xf32>
    %17 = arith.subf %15, %14 : vector<16x256xf32>
    %18 = math.absf %17 : vector<16x256xf32>
    %19 = arith.addf %16, %18 : vector<16x256xf32>
    %c255_i32_11 = arith.constant 255 : i32
    %20 = tpu.dynamic_rotate %14 by %c255_i32_11 dim 1 : vector<16x256xf32>, i32 -> vector<16x256xf32>
    %21 = arith.subf %14, %20 : vector<16x256xf32>
    %22 = math.absf %21 : vector<16x256xf32>
    %c255_i32_12 = arith.constant 255 : i32
    %23 = tpu.dynamic_rotate %15 by %c255_i32_12 dim 1 : vector<16x256xf32>, i32 -> vector<16x256xf32>
    %24 = arith.subf %15, %23 : vector<16x256xf32>
    %25 = math.absf %24 : vector<16x256xf32>
    %c255_i32_13 = arith.constant 255 : i32
    %26 = tpu.dynamic_rotate %1 by %c255_i32_13 dim 1 : vector<16x256xf32>, i32 -> vector<16x256xf32>
    %27 = arith.subf %1, %26 : vector<16x256xf32>
    %28 = math.absf %27 : vector<16x256xf32>
    %c255_i32_14 = arith.constant 255 : i32
    %29 = tpu.dynamic_rotate %3 by %c255_i32_14 dim 1 : vector<16x256xf32>, i32 -> vector<16x256xf32>
    %30 = arith.subf %3, %29 : vector<16x256xf32>
    %31 = math.absf %30 : vector<16x256xf32>
    %cst = arith.constant 0.00999999977 : f32
    %32 = vector.broadcast %cst : f32 to vector<16x256xf32>
    %33 = arith.cmpf olt, %22, %32 : vector<16x256xf32>
    %34 = arith.extui %33 : vector<16x256xi1> to vector<16x256xi32>
    %35 = arith.sitofp %34 : vector<16x256xi32> to vector<16x256xf32>
    %36 = arith.mulf %1, %35 : vector<16x256xf32>
    %37 = arith.mulf %36, %12 : vector<16x256xf32>
    %38 = arith.subf %25, %22 : vector<16x256xf32>
    %39 = math.absf %38 : vector<16x256xf32>
    %40 = arith.mulf %37, %39 : vector<16x256xf32>
    %41 = arith.mulf %12, %28 : vector<16x256xf32>
    %cst_15 = arith.constant 1.000000e+00 : f32
    %42 = vector.broadcast %cst_15 : f32 to vector<16x256xf32>
    %43 = arith.subf %31, %42 : vector<16x256xf32>
    %44 = math.absf %43 : vector<16x256xf32>
    %45 = arith.mulf %41, %44 : vector<16x256xf32>
    %46 = arith.addf %40, %45 : vector<16x256xf32>
    %cst_16 = arith.constant 1.22070313E-4 : f32
    %47 = vector.broadcast %cst_16 : f32 to vector<16x256xf32>
    %48 = arith.mulf %19, %47 : vector<16x256xf32>
    %cst_17 = arith.constant 1.22549027E-4 : f32
    %49 = vector.broadcast %cst_17 : f32 to vector<16x256xf32>
    %50 = arith.mulf %46, %49 : vector<16x256xf32>
    %51 = arith.addf %48, %50 : vector<16x256xf32>
    %52 = vector.shape_cast %51 : vector<16x256xf32> to vector<1x16x256xf32>
    %cst_18 = arith.constant dense<0.000000e+00> : vector<1xf32>
    %53 = vector.multi_reduction <add>, %52, %cst_18 [1, 2] : vector<1x16x256xf32> to vector<1xf32>
    %54 = vector.shape_cast %53 : vector<1xf32> to vector<1x1x1xf32>
    %55 = vector.extract %54[0, 0, 0] : f32 from vector<1x1x1xf32>
    %56 = tpu.iota {dimensions = array<i32: 0>} : vector<8x128xi32>
    %57 = tpu.iota {dimensions = array<i32: 1>} : vector<8x128xi32>
    %c0_i32 = arith.constant 0 : i32
    %58 = vector.broadcast %c0_i32 : i32 to vector<8x128xi32>
    %59 = arith.cmpi eq, %56, %58 : vector<8x128xi32>
    %c0_i32_19 = arith.constant 0 : i32
    %60 = vector.broadcast %c0_i32_19 : i32 to vector<8x128xi32>
    %61 = arith.cmpi eq, %57, %60 : vector<8x128xi32>
    %62 = arith.andi %59, %61 : vector<8x128xi1>
    %63 = arith.extui %62 : vector<8x128xi1> to vector<8x128xi32>
    %64 = arith.sitofp %63 : vector<8x128xi32> to vector<8x128xf32>
    %65 = vector.broadcast %55 : f32 to vector<8x128xf32>
    %66 = arith.mulf %64, %65 : vector<8x128xf32>
    %67 = vector.shape_cast %66 : vector<8x128xf32> to vector<1x1x8x128xf32>
    %c0_20 = arith.constant 0 : index
    %c0_21 = arith.constant 0 : index
    %c0_22 = arith.constant 0 : index
    %c0_23 = arith.constant 0 : index
    %68 = vector.load %arg6[%c0_20, %c0_21, %c0_22, %c0_23] : memref<1x1x8x128xf32, #tpu.memory_space<vmem>>, vector<1x1x8x128xf32>
    tpu.vector_store %arg6[%c0_20, %c0_21, %c0_22, %c0_23], %67 {strides = array<i32>} : memref<1x1x8x128xf32, #tpu.memory_space<vmem>>, vector<1x1x8x128xf32>,
    return
  }
  func.func @transform_0(%arg0: i32, %arg1: i32) -> (i32, i32, i32) {
    %c0_i32 = arith.constant 0 : i32
    %c0_i32_0 = arith.constant 0 : i32
    return %arg0, %arg1, %c0_i32 : i32, i32, i32
  }
  func.func @transform_1(%arg0: i32, %arg1: i32) -> (i32, i32, i32) {
    %c0_i32 = arith.constant 0 : i32
    %c0_i32_0 = arith.constant 0 : i32
    return %arg0, %arg1, %c0_i32 : i32, i32, i32
  }
  func.func @transform_2(%arg0: i32, %arg1: i32) -> (i32, i32, i32) {
    %c0_i32 = arith.constant 0 : i32
    %c0_i32_0 = arith.constant 0 : i32
    return %arg0, %arg1, %c0_i32 : i32, i32, i32
  }
  func.func @transform_3(%arg0: i32, %arg1: i32) -> (i32, i32, i32) {
    %c0_i32 = arith.constant 0 : i32
    %c0_i32_0 = arith.constant 0 : i32
    return %arg0, %arg1, %c0_i32 : i32, i32, i32
  }
  func.func @transform_4(%arg0: i32, %arg1: i32) -> (i32, i32, i32, i32) {
    %c0_i32 = arith.constant 0 : i32
    %c0_i32_0 = arith.constant 0 : i32
    %c0_i32_1 = arith.constant 0 : i32
    return %arg0, %arg1, %c0_i32, %c0_i32_0 : i32, i32, i32, i32
  }
}

</mosaic_0001>

<llo_original>
// kernel: tpu_custom_call.1
$region0: #{tpu_custom_call.1}
  #allocation0 [shape = 'u32[]', space=smem, size = 0x4, offset = 0x4, fixed_abs, tag = 'smem constant byte address 0x4 - core index']
  #allocation1 [shape = 'u32[144,128]{1,0:T(1,128)}', space=vmem, size = 0x12000, scoped, tag = 'internal scratch']
  %s0 = inlined_call_operand.hbm [shape: f32[2,16,256], index: 0, kind: input, shape index: {}]
  %s1 = inlined_call_operand.hbm [shape: f32[2,16,256], index: 1, kind: input, shape index: {}]
  %s2 = inlined_call_operand.hbm [shape: f32[2,16,256], index: 2, kind: input, shape index: {}]
  %s3 = inlined_call_operand.hbm [shape: f32[2,16,256], index: 3, kind: input, shape index: {}]
  %s4 = inlined_call_operand.hbm [shape: f32[2,1,8,128], index: 4, kind: output, shape index: {}]
  %s5 = sld [smem:[#allocation0]]
  $region65: #{tpu_custom_call.1} parent=0
    _
  %s7 = ssub.s32 1, %s5
  %s8 = scalar_select 0, %s7, %s5
  $region1: #{tpu_custom_call.1} parent=0
    #allocation2 [shape = 'u8[32768]{0}', space=vmem, size = 0x8000, scoped, tag = 'input window, operand 0']
    #allocation3 [shape = 's32[2]{0}', space=sflag, size = 0x8, scoped, tag = 'scoped memory for tpu_custom_call.1']
    #allocation4 [shape = 's32[2]{0}', space=sflag, size = 0x8, scoped, tag = 'scoped memory for tpu_custom_call.1']
    #allocation5 [shape = 'u8[32768]{0}', space=vmem, size = 0x8000, scoped, tag = 'input window, operand 1']
    #allocation6 [shape = 's32[2]{0}', space=sflag, size = 0x8, scoped, tag = 'scoped memory for tpu_custom_call.1']
    #allocation7 [shape = 'u8[32768]{0}', space=vmem, size = 0x8000, scoped, tag = 'input window, operand 2']
    #allocation8 [shape = 'u8[32768]{0}', space=vmem, size = 0x8000, scoped, tag = 'input window, operand 3']
    #allocation9 [shape = 's32[2]{0}', space=sflag, size = 0x8, scoped, tag = 'scoped memory for tpu_custom_call.1']
    #allocation10 [shape = 'u8[8192]{0}', space=vmem, size = 0x2000, scoped, tag = 'output window, operand 0']
    %9 = vsyncpa [#allocation3], 0
    %s10 = scalar_lea.sflag [#allocation3], 1
    %11 = vsyncpa %s10, 0
    %12 = vsyncpa [#allocation6], 0
    %s13 = scalar_lea.sflag [#allocation6], 1
    %14 = vsyncpa %s13, 0
    %15 = vsyncpa [#allocation9], 0
    %s16 = scalar_lea.sflag [#allocation9], 1
    %17 = vsyncpa %s16, 0
    %18 = vsyncpa [#allocation4], 0
    %s19 = scalar_lea.sflag [#allocation4], 1
    %20 = vsyncpa %s19, 0
    loop: start=0, step=1, limit=4
    $region2: #{tpu_custom_call.1} parent=1 // loop_pre_header
      _
    $region3: #{tpu_custom_call.1} parent=1 // loop_header
      %s22 = sphi 0, %s26
      %p23 = scmp.ge.s32.totalorder %s22, 4
      %s29 = sphi 0, %s41
      %s30 = sphi 0, %s37
      %s31 = sphi 0, %s29
      %s32 = sphi 0, %s30
      %s33 = sphi 0, %s31
      %s34 = sphi 0, %s32
      %s46 = sphi 0, %s48
      %s49 = sphi 0, %s46
      %s50 = sphi 0, %s49
      %s66 = sphi 0, %s50
      %s74 = sphi 0, %s76
      %s77 = sphi 0, %s74
      %s78 = sphi 0, %s77
      %s94 = sphi 0, %s78
      %s102 = sphi 0, %s104
      %s105 = sphi 0, %s102
      %s106 = sphi 0, %s105
      %s122 = sphi 0, %s106
      %s130 = sphi 0, %s132
      %s133 = sphi 0, %s130
      %s134 = sphi 0, %s133
      %s150 = sphi 0, %s134
      %s158 = sphi 0, %s160
      %s161 = sphi 0, %s158
      %s162 = sphi 0, %s161
      %s178 = sphi 0, %s162
    $region4: #{tpu_custom_call.1} parent=1 // loop_header_branch
      %25 = sbr.rel (%p23) target = $region8
    $region5: #{tpu_custom_call.1} parent=1 // loop_body
      %s27 = ssub.s32 %s22, 1
      %s28 = ssub.s32 %s22, 2
      %s35 = sadd.s32 1, %s30
      %p36 = scmp.ge.s32.totalorder %s35, 1
      %s37 = scalar_select %p36, 0, %s35
      %s38 = sadd.s32 1, %s29
      %s39 = scalar_select %p36, %s38, %s29
      %p40 = scmp.ge.s32.totalorder %s39, 2
      %s41 = scalar_select %p40, 0, %s39
      %s42 = ssub.s32 %s29, %s41
      %s43 = ssub.s32 %s30, %s37
      %s44 = sor.u32 %s42, %s43
      %p45 = scmp.eq.s32.totalorder %s44, 0
      %s47 = sadd.s32 %s46, 1
      %s48 = scalar_select %p45, %s46, %s47
      %p51 = pneg %p45
      %p52 = scmp.eq.s32.totalorder %s22, 1
      %p53 = por %p51, %p52
      %p54 = scmp.ne.s32.totalorder %s46, %s49
      %p55 = scmp.eq.s32.totalorder %s22, 0
      %p56 = por %p54, %p55
      %p57 = scmp.ne.s32.totalorder %s46, %s49
      %p58 = scmp.eq.s32.totalorder %s27, 1
      %p59 = por %p57, %p58
      %p60 = scmp.ne.s32.totalorder %s49, %s50
      %p61 = scmp.eq.s32.totalorder %s27, 0
      %p62 = por %p60, %p61
      %p63 = scmp.ne.s32.totalorder %s49, %s50
      %p64 = scmp.eq.s32.totalorder %s28, 1
      %p65 = por %p63, %p64
      %p67 = scmp.ne.s32.totalorder %s50, %s66
      %p68 = scmp.eq.s32.totalorder %s28, 0
      %p69 = por %p67, %p68
      %s70 = ssub.s32 %s29, %s41
      %s71 = ssub.s32 %s30, %s37
      %s72 = sor.u32 %s70, %s71
      %p73 = scmp.eq.s32.totalorder %s72, 0
      %s75 = sadd.s32 %s74, 1
      %s76 = scalar_select %p73, %s74, %s75
      %p79 = pneg %p73
      %p80 = scmp.eq.s32.totalorder %s22, 1
      %p81 = por %p79, %p80
      %p82 = scmp.ne.s32.totalorder %s74, %s77
      %p83 = scmp.eq.s32.totalorder %s22, 0
      %p84 = por %p82, %p83
      %p85 = scmp.ne.s32.totalorder %s74, %s77
      %p86 = scmp.eq.s32.totalorder %s27, 1
      %p87 = por %p85, %p86
      %p88 = scmp.ne.s32.totalorder %s77, %s78
      %p89 = scmp.eq.s32.totalorder %s27, 0
      %p90 = por %p88, %p89
      %p91 = scmp.ne.s32.totalorder %s77, %s78
      %p92 = scmp.eq.s32.totalorder %s28, 1
      %p93 = por %p91, %p92
      %p95 = scmp.ne.s32.totalorder %s78, %s94
      %p96 = scmp.eq.s32.totalorder %s28, 0
      %p97 = por %p95, %p96
      %s98 = ssub.s32 %s29, %s41
      %s99 = ssub.s32 %s30, %s37
      %s100 = sor.u32 %s98, %s99
      %p101 = scmp.eq.s32.totalorder %s100, 0
      %s103 = sadd.s32 %s102, 1
      %s104 = scalar_select %p101, %s102, %s103
      %p107 = pneg %p101
      %p108 = scmp.eq.s32.totalorder %s22, 1
      %p109 = por %p107, %p108
      %p110 = scmp.ne.s32.totalorder %s102, %s105
      %p111 = scmp.eq.s32.totalorder %s22, 0
      %p112 = por %p110, %p111
      %p113 = scmp.ne.s32.totalorder %s102, %s105
      %p114 = scmp.eq.s32.totalorder %s27, 1
      %p115 = por %p113, %p114
      %p116 = scmp.ne.s32.totalorder %s105, %s106
      %p117 = scmp.eq.s32.totalorder %s27, 0
      %p118 = por %p116, %p117
      %p119 = scmp.ne.s32.totalorder %s105, %s106
      %p120 = scmp.eq.s32.totalorder %s28, 1
      %p121 = por %p119, %p120
      %p123 = scmp.ne.s32.totalorder %s106, %s122
      %p124 = scmp.eq.s32.totalorder %s28, 0
      %p125 = por %p123, %p124
      %s126 = ssub.s32 %s29, %s41
      %s127 = ssub.s32 %s30, %s37
      %s128 = sor.u32 %s126, %s127
      %p129 = scmp.eq.s32.totalorder %s128, 0
      %s131 = sadd.s32 %s130, 1
      %s132 = scalar_select %p129, %s130, %s131
      %p135 = pneg %p129
      %p136 = scmp.eq.s32.totalorder %s22, 1
      %p137 = por %p135, %p136
      %p138 = scmp.ne.s32.totalorder %s130, %s133
      %p139 = scmp.eq.s32.totalorder %s22, 0
      %p140 = por %p138, %p139
      %p141 = scmp.ne.s32.totalorder %s130, %s133
      %p142 = scmp.eq.s32.totalorder %s27, 1
      %p143 = por %p141, %p142
      %p144 = scmp.ne.s32.totalorder %s133, %s134
      %p145 = scmp.eq.s32.totalorder %s27, 0
      %p146 = por %p144, %p145
      %p147 = scmp.ne.s32.totalorder %s133, %s134
      %p148 = scmp.eq.s32.totalorder %s28, 1
      %p149 = por %p147, %p148
      %p151 = scmp.ne.s32.totalorder %s134, %s150
      %p152 = scmp.eq.s32.totalorder %s28, 0
      %p153 = por %p151, %p152
      %s154 = ssub.s32 %s29, %s41
      %s155 = ssub.s32 %s30, %s37
      %s156 = sor.u32 %s154, %s155
      %p157 = scmp.eq.s32.totalorder %s156, 0
      %s159 = sadd.s32 %s158, 1
      %s160 = scalar_select %p157, %s158, %s159
      %p163 = pneg %p157
      %p164 = scmp.eq.s32.totalorder %s22, 1
      %p165 = por %p163, %p164
      %p166 = scmp.ne.s32.totalorder %s158, %s161
      %p167 = scmp.eq.s32.totalorder %s22, 0
      %p168 = por %p166, %p167
      %p169 = scmp.ne.s32.totalorder %s158, %s161
      %p170 = scmp.eq.s32.totalorder %s27, 1
      %p171 = por %p169, %p170
      %p172 = scmp.ne.s32.totalorder %s161, %s162
      %p173 = scmp.eq.s32.totalorder %s27, 0
      %p174 = por %p172, %p173
      %p175 = scmp.ne.s32.totalorder %s161, %s162
      %p176 = scmp.eq.s32.totalorder %s28, 1
      %p177 = por %p175, %p176
      %p179 = scmp.ne.s32.totalorder %s162, %s178
      %p180 = scmp.eq.s32.totalorder %s28, 0
      %p181 = por %p179, %p180
      %p182 = scmp.le.s32.totalorder 1, %s22
      %p183 = scmp.lt.s32.totalorder %s22, 3
      %p184 = pnand %p182, %p183
      %p185 = pneg %p184
      // Predicated region
      $region9: #{tpu_custom_call.1} parent=5 // pred_check
        _
      $region10: #{tpu_custom_call.1} parent=5 // pred_check_branch
        %187 = sbr.rel (%p184) target = $region12
      $region11: #{tpu_custom_call.1} parent=5 // pred_region
        %s188 = ssub.s32 %s22, 1
      $region12: #{tpu_custom_call.1} parent=5 // pred_fallthru
        _
      %p189 = scmp.lt.s32.totalorder %s22, 2
      // Predicated region
      $region13: #{tpu_custom_call.1} parent=5 // pred_check
        %p190 = pneg %p189
      $region14: #{tpu_custom_call.1} parent=5 // pred_check_branch
        %192 = sbr.rel (%p190) target = $region16
      $region15: #{tpu_custom_call.1} parent=5 // pred_region
        // Predicated region
        $region17: #{tpu_custom_call.1} parent=15 // pred_check
          %p193 = pneg %p56
        $region18: #{tpu_custom_call.1} parent=15 // pred_check_branch
          %195 = sbr.rel (%p193) target = $region20
        $region19: #{tpu_custom_call.1} parent=15 // pred_region
          %s196 = sand.u32 %s46, 1
          %s197 = scalar_lea.sflag [#allocation3], %s196
          %s198 = sand.u32 %s46, 1
          %s199 = smul.addr %s198, 32
          %s200 = scalar_lea.vmem [#allocation2], %s199
          %s201 = smul.u32 2, %s30
          %s203 = ssub.s32 512, 512
          %204 = vsyncadd %s197, %s203
          %s205 = smul.addr %s201, 2
          %s206 = smul.addr %s29, 4
          %s207 = sadd.s32 %s205, %s206
          %s208 = smul.addr %s207, 128
          %s209 = scalar_lea.hbm %s0, %s208
          %s210 = sshll.u32 %s200, 4
          %s211 = int_to_ptr.vmem [resolvable:$true] %s210
          %216 = dma.hbm_to_vmem [thread:$0]  %s209, 512, %s211, %s197, 256, 256, 16
        $region20: #{tpu_custom_call.1} parent=15 // pred_fallthru
          _
        // Predicated region
        $region21: #{tpu_custom_call.1} parent=15 // pred_check
          %p217 = pneg %p84
        $region22: #{tpu_custom_call.1} parent=15 // pred_check_branch
          %219 = sbr.rel (%p217) target = $region24
        $region23: #{tpu_custom_call.1} parent=15 // pred_region
          %s220 = sand.u32 %s22, 1
          %s221 = scalar_lea.sflag [#allocation6], %s220
          %s222 = sand.u32 %s74, 1
          %s223 = smul.addr %s222, 32
          %s224 = scalar_lea.vmem [#allocation5], %s223
          %s225 = smul.u32 2, %s30
          %s227 = ssub.s32 512, 512
          %228 = vsyncadd %s221, %s227
          %s229 = smul.addr %s225, 2
          %s230 = smul.addr %s29, 4
          %s231 = sadd.s32 %s229, %s230
          %s232 = smul.addr %s231, 128
          %s233 = scalar_lea.hbm %s1, %s232
          %s234 = sshll.u32 %s224, 4
          %s235 = int_to_ptr.vmem [resolvable:$true] %s234
          %240 = dma.hbm_to_vmem [thread:$0]  %s233, 512, %s235, %s221, 256, 256, 16
        $region24: #{tpu_custom_call.1} parent=15 // pred_fallthru
          _
        // Predicated region
        $region25: #{tpu_custom_call.1} parent=15 // pred_check
          %p241 = pneg %p112
        $region26: #{tpu_custom_call.1} parent=15 // pred_check_branch
          %243 = sbr.rel (%p241) target = $region28
        $region27: #{tpu_custom_call.1} parent=15 // pred_region
          %s244 = sand.u32 %s22, 1
          %s245 = scalar_lea.sflag [#allocation6], %s244
          %s246 = sand.u32 %s102, 1
          %s247 = smul.addr %s246, 32
          %s248 = scalar_lea.vmem [#allocation7], %s247
          %s249 = smul.u32 2, %s30
          %s251 = ssub.s32 512, 512
          %252 = vsyncadd %s245, %s251
          %s253 = smul.addr %s249, 2
          %s254 = smul.addr %s29, 4
          %s255 = sadd.s32 %s253, %s254
          %s256 = smul.addr %s255, 128
          %s257 = scalar_lea.hbm %s2, %s256
          %s258 = sshll.u32 %s248, 4
          %s259 = int_to_ptr.vmem [resolvable:$true] %s258
          %264 = dma.hbm_to_vmem [thread:$0]  %s257, 512, %s259, %s245, 256, 256, 16
        $region28: #{tpu_custom_call.1} parent=15 // pred_fallthru
          _
        // Predicated region
        $region29: #{tpu_custom_call.1} parent=15 // pred_check
          %p265 = pneg %p140
        $region30: #{tpu_custom_call.1} parent=15 // pred_check_branch
          %267 = sbr.rel (%p265) target = $region32
        $region31: #{tpu_custom_call.1} parent=15 // pred_region
          %s268 = sand.u32 %s130, 1
          %s269 = scalar_lea.sflag [#allocation9], %s268
          %s270 = sand.u32 %s130, 1
          %s271 = smul.addr %s270, 32
          %s272 = scalar_lea.vmem [#allocation8], %s271
          %s273 = smul.u32 2, %s30
          %s275 = ssub.s32 512, 512
          %276 = vsyncadd %s269, %s275
          %s277 = smul.addr %s273, 2
          %s278 = smul.addr %s29, 4
          %s279 = sadd.s32 %s277, %s278
          %s280 = smul.addr %s279, 128
          %s281 = scalar_lea.hbm %s3, %s280
          %s282 = sshll.u32 %s272, 4
          %s283 = int_to_ptr.vmem [resolvable:$true] %s282
          %288 = dma.hbm_to_vmem [thread:$0]  %s281, 512, %s283, %s269, 256, 256, 16
        $region32: #{tpu_custom_call.1} parent=15 // pred_fallthru
          _
      $region16: #{tpu_custom_call.1} parent=5 // pred_fallthru
        _
      %p289 = scmp.le.s32.totalorder 1, %s22
      %p290 = scmp.lt.s32.totalorder %s22, 3
      %p291 = pnand %p289, %p290
      %p292 = pneg %p291
      // Predicated region
      $region33: #{tpu_custom_call.1} parent=5 // pred_check
        _
      $region34: #{tpu_custom_call.1} parent=5 // pred_check_branch
        %294 = sbr.rel (%p291) target = $region36
      $region35: #{tpu_custom_call.1} parent=5 // pred_region
        %s295 = ssub.s32 %s22, 1
        %s296 = sand.u32 %s49, 1
        %s297 = scalar_lea.sflag [#allocation3], %s296
        %s298 = sand.u32 %s49, 1
        %s299 = smul.addr %s298, 32
        %s300 = scalar_lea.vmem [#allocation2], %s299
        // Predicated region
        $region37: #{tpu_custom_call.1} parent=35 // pred_check
          %p301 = pneg %p62
        $region38: #{tpu_custom_call.1} parent=35 // pred_check_branch
          %303 = sbr.rel (%p301) target = $region40
        $region39: #{tpu_custom_call.1} parent=35 // pred_region
          %304 = dma.done %s297, 512
        $region40: #{tpu_custom_call.1} parent=35 // pred_fallthru
          _
        %s305 = sand.u32 %s27, 1
        %s306 = scalar_lea.sflag [#allocation6], %s305
        %s307 = sand.u32 %s77, 1
        %s308 = smul.addr %s307, 32
        %s309 = scalar_lea.vmem [#allocation5], %s308
        // Predicated region
        $region41: #{tpu_custom_call.1} parent=35 // pred_check
          %p310 = pneg %p90
        $region42: #{tpu_custom_call.1} parent=35 // pred_check_branch
          %312 = sbr.rel (%p310) target = $region44
        $region43: #{tpu_custom_call.1} parent=35 // pred_region
          %313 = dma.done %s306, 512
        $region44: #{tpu_custom_call.1} parent=35 // pred_fallthru
          _
        %s314 = sand.u32 %s27, 1
        %s315 = scalar_lea.sflag [#allocation6], %s314
        %s316 = sand.u32 %s105, 1
        %s317 = smul.addr %s316, 32
        %s318 = scalar_lea.vmem [#allocation7], %s317
        // Predicated region
        $region45: #{tpu_custom_call.1} parent=35 // pred_check
          %p319 = pneg %p118
        $region46: #{tpu_custom_call.1} parent=35 // pred_check_branch
          %321 = sbr.rel (%p319) target = $region48
        $region47: #{tpu_custom_call.1} parent=35 // pred_region
          %322 = dma.done %s315, 512
        $region48: #{tpu_custom_call.1} parent=35 // pred_fallthru
          _
        %s323 = sand.u32 %s133, 1
        %s324 = scalar_lea.sflag [#allocation9], %s323
        %s325 = sand.u32 %s133, 1
        %s326 = smul.addr %s325, 32
        %s327 = scalar_lea.vmem [#allocation8], %s326
        // Predicated region
        $region49: #{tpu_custom_call.1} parent=35 // pred_check
          %p328 = pneg %p146
        $region50: #{tpu_custom_call.1} parent=35 // pred_check_branch
          %330 = sbr.rel (%p328) target = $region52
        $region51: #{tpu_custom_call.1} parent=35 // pred_region
          %331 = dma.done %s324, 512
        $region52: #{tpu_custom_call.1} parent=35 // pred_fallthru
          _
        %s332 = sand.u32 %s49, 1
        %s333 = scalar_lea.sflag [#allocation3], %s332
        %s334 = sand.u32 %s49, 1
        %s335 = smul.addr %s334, 32
        %s336 = scalar_lea.vmem [#allocation2], %s335
        %p337 = pneg %p62
        %p338 = pneg %p59
        %s339 = sand.u32 %s27, 1
        %s340 = scalar_lea.sflag [#allocation6], %s339
        %s341 = sand.u32 %s77, 1
        %s342 = smul.addr %s341, 32
        %s343 = scalar_lea.vmem [#allocation5], %s342
        %p344 = pneg %p90
        %p345 = pneg %p87
        %s346 = sand.u32 %s27, 1
        %s347 = scalar_lea.sflag [#allocation6], %s346
        %s348 = sand.u32 %s105, 1
        %s349 = smul.addr %s348, 32
        %s350 = scalar_lea.vmem [#allocation7], %s349
        %p351 = pneg %p118
        %p352 = pneg %p115
        %s353 = sand.u32 %s133, 1
        %s354 = scalar_lea.sflag [#allocation9], %s353
        %s355 = sand.u32 %s133, 1
        %s356 = smul.addr %s355, 32
        %s357 = scalar_lea.vmem [#allocation8], %s356
        %p358 = pneg %p146
        %p359 = pneg %p143
        %p360 = pneg %p174
        %p361 = pneg %p171
        %s362 = sand.u32 %s161, 1
        %s363 = scalar_lea.sflag [#allocation4], %s362
        %s364 = sand.u32 %s161, 1
        %s365 = smul.addr %s364, 8
        %s366 = scalar_lea.vmem [#allocation10], %s365
        %s367 = smul.u32 2, %s32
        %s368 = smul.u32 2, %s32
        %s369 = smul.u32 2, %s32
        %s370 = smul.u32 2, %s32
        %v371 = vld [vmem:[%s300] sm:$0xff]
        %v372 = vld [vmem:[%s300 + $0x8] sm:$0xff]
        %v373 = vld [vmem:[%s300 + $0x10] sm:$0xff]
        %v374 = vld [vmem:[%s300 + $0x18] sm:$0xff]
        %v375 = vld [vmem:[%s309] sm:$0xff]
        %v376 = vld [vmem:[%s309 + $0x8] sm:$0xff]
        %v377 = vld [vmem:[%s309 + $0x10] sm:$0xff]
        %v378 = vld [vmem:[%s309 + $0x18] sm:$0xff]
        %v379 = vld [vmem:[%s318] sm:$0xff]
        %v380 = vld [vmem:[%s318 + $0x8] sm:$0xff]
        %v381 = vld [vmem:[%s318 + $0x10] sm:$0xff]
        %v382 = vld [vmem:[%s318 + $0x18] sm:$0xff]
        %v383 = vld [vmem:[%s327] sm:$0xff]
        %v384 = vld [vmem:[%s327 + $0x8] sm:$0xff]
        %v385 = vld [vmem:[%s327 + $0x10] sm:$0xff]
        %v386 = vld [vmem:[%s327 + $0x18] sm:$0xff]
        %v387 = vlaneseq
        %v388 = vand.u32 %v387, 127
        %v389 = vadd.s32 %v388, 128
        %vm390 = vcmp.lt.s32.totalorder %v388, 255
        %vm391 = vcmp.lt.s32.totalorder %v389, 255
        %v392 = vsel %vm390, 1, 0
        %v393 = vsel %vm391, 1, 0
        %v394 = vcvt.s32.f32 %v392
        %v395 = vcvt.s32.f32 %v393
        %v396 = vsub.f32 %v371, %v375
        %v397 = vsub.f32 %v372, %v376
        %v398 = vsub.f32 %v373, %v377
        %v399 = vsub.f32 %v374, %v378
        %v400 = vmul.f32 %v379, %v371
        %v401 = vmul.f32 %v380, %v372
        %v402 = vmul.f32 %v381, %v373
        %v403 = vmul.f32 %v382, %v374
        %v404 = vmul.f32 %v383, %v371
        %v405 = vmul.f32 %v384, %v372
        %v406 = vmul.f32 %v385, %v373
        %v407 = vmul.f32 %v386, %v374
        %v408 = vmul.f32 %v396, %v396
        %v409 = vmul.f32 %v397, %v397
        %v410 = vmul.f32 %v398, %v398
        %v411 = vmul.f32 %v399, %v399
        %v412 = vsub.f32 %v404, %v400
        %v413 = vsub.f32 %v405, %v401
        %v414 = vsub.f32 %v406, %v402
        %v415 = vsub.f32 %v407, %v403
        %v416 = vand.u32 2147483647, %v412
        %v417 = vand.u32 2147483647, %v413
        %v418 = vand.u32 2147483647, %v414
        %v419 = vand.u32 2147483647, %v415
        %v420 = vadd.f32 %v408, %v416
        %v421 = vadd.f32 %v409, %v417
        %v422 = vadd.f32 %v410, %v418
        %v423 = vadd.f32 %v411, %v419
        %424 = vrot.lane.b32.xlu0 %v400, 127
        %v425 = vpop.permute.xlu0 %424
        %426 = vrot.lane.b32.xlu0 %v402, 127
        %v427 = vpop.permute.xlu0 %426
        %428 = vrot.lane.b32.xlu0 %v401, 127
        %v429 = vpop.permute.xlu0 %428
        %430 = vrot.lane.b32.xlu0 %v403, 127
        %v431 = vpop.permute.xlu0 %430
        %vm432 = vcmp.lt.s32.totalorder %v388, 127
        %v433 = vsel %vm432, %v425, %v429
        %v434 = vsel %vm432, %v427, %v431
        %v435 = vsel %vm432, %v429, %v425
        %v436 = vsel %vm432, %v431, %v427
        %v437 = vsub.f32 %v400, %v433
        %v438 = vsub.f32 %v401, %v435
        %v439 = vsub.f32 %v402, %v434
        %v440 = vsub.f32 %v403, %v436
        %v441 = vand.u32 2147483647, %v437
        %v442 = vand.u32 2147483647, %v438
        %v443 = vand.u32 2147483647, %v439
        %v444 = vand.u32 2147483647, %v440
        %445 = vrot.lane.b32.xlu0 %v404, 127
        %v446 = vpop.permute.xlu0 %445
        %447 = vrot.lane.b32.xlu0 %v406, 127
        %v448 = vpop.permute.xlu0 %447
        %449 = vrot.lane.b32.xlu0 %v405, 127
        %v450 = vpop.permute.xlu0 %449
        %451 = vrot.lane.b32.xlu0 %v407, 127
        %v452 = vpop.permute.xlu0 %451
        %v453 = vsel %vm432, %v446, %v450
        %v454 = vsel %vm432, %v448, %v452
        %v455 = vsel %vm432, %v450, %v446
        %v456 = vsel %vm432, %v452, %v448
        %v457 = vsub.f32 %v404, %v453
        %v458 = vsub.f32 %v405, %v455
        %v459 = vsub.f32 %v406, %v454
        %v460 = vsub.f32 %v407, %v456
        %v461 = vand.u32 2147483647, %v457
        %v462 = vand.u32 2147483647, %v458
        %v463 = vand.u32 2147483647, %v459
        %v464 = vand.u32 2147483647, %v460
        %465 = vrot.lane.b32.xlu0 %v371, 127
        %v466 = vpop.permute.xlu0 %465
        %467 = vrot.lane.b32.xlu0 %v373, 127
        %v468 = vpop.permute.xlu0 %467
        %469 = vrot.lane.b32.xlu0 %v372, 127
        %v470 = vpop.permute.xlu0 %469
        %471 = vrot.lane.b32.xlu0 %v374, 127
        %v472 = vpop.permute.xlu0 %471
        %v473 = vsel %vm432, %v466, %v470
        %v474 = vsel %vm432, %v468, %v472
        %v475 = vsel %vm432, %v470, %v466
        %v476 = vsel %vm432, %v472, %v468
        %v477 = vsub.f32 %v371, %v473
        %v478 = vsub.f32 %v372, %v475
        %v479 = vsub.f32 %v373, %v474
        %v480 = vsub.f32 %v374, %v476
        %v481 = vand.u32 2147483647, %v477
        %v482 = vand.u32 2147483647, %v478
        %v483 = vand.u32 2147483647, %v479
        %v484 = vand.u32 2147483647, %v480
        %485 = vrot.lane.b32.xlu0 %v375, 127
        %v486 = vpop.permute.xlu0 %485
        %487 = vrot.lane.b32.xlu0 %v377, 127
        %v488 = vpop.permute.xlu0 %487
        %489 = vrot.lane.b32.xlu0 %v376, 127
        %v490 = vpop.permute.xlu0 %489
        %491 = vrot.lane.b32.xlu0 %v378, 127
        %v492 = vpop.permute.xlu0 %491
        %v493 = vsel %vm432, %v486, %v490
        %v494 = vsel %vm432, %v488, %v492
        %v495 = vsel %vm432, %v490, %v486
        %v496 = vsel %vm432, %v492, %v488
        %v497 = vsub.f32 %v375, %v493
        %v498 = vsub.f32 %v376, %v495
        %v499 = vsub.f32 %v377, %v494
        %v500 = vsub.f32 %v378, %v496
        %v501 = vand.u32 2147483647, %v497
        %v502 = vand.u32 2147483647, %v498
        %v503 = vand.u32 2147483647, %v499
        %v504 = vand.u32 2147483647, %v500
        %vm505 = vcmp.lt.f32.partialorder %v441, 0.01
        %vm506 = vcmp.lt.f32.partialorder %v442, 0.01
        %vm507 = vcmp.lt.f32.partialorder %v443, 0.01
        %vm508 = vcmp.lt.f32.partialorder %v444, 0.01
        %v509 = vsel %vm505, 1, 0
        %v510 = vsel %vm506, 1, 0
        %v511 = vsel %vm507, 1, 0
        %v512 = vsel %vm508, 1, 0
        %v513 = vcvt.s32.f32 %v509
        %v514 = vcvt.s32.f32 %v510
        %v515 = vcvt.s32.f32 %v511
        %v516 = vcvt.s32.f32 %v512
        %v517 = vmul.f32 %v371, %v513
        %v518 = vmul.f32 %v372, %v514
        %v519 = vmul.f32 %v373, %v515
        %v520 = vmul.f32 %v374, %v516
        %v521 = vmul.f32 %v517, %v394
        %v522 = vmul.f32 %v518, %v395
        %v523 = vmul.f32 %v519, %v394
        %v524 = vmul.f32 %v520, %v395
        %v525 = vsub.f32 %v461, %v441
        %v526 = vsub.f32 %v462, %v442
        %v527 = vsub.f32 %v463, %v443
        %v528 = vsub.f32 %v464, %v444
        %v529 = vand.u32 2147483647, %v525
        %v530 = vand.u32 2147483647, %v526
        %v531 = vand.u32 2147483647, %v527
        %v532 = vand.u32 2147483647, %v528
        %v533 = vmul.f32 %v521, %v529
        %v534 = vmul.f32 %v522, %v530
        %v535 = vmul.f32 %v523, %v531
        %v536 = vmul.f32 %v524, %v532
        %v537 = vmul.f32 %v394, %v481
        %v538 = vmul.f32 %v395, %v482
        %v539 = vmul.f32 %v394, %v483
        %v540 = vmul.f32 %v395, %v484
        %v541 = vsub.f32 %v501, 1.0
        %v542 = vsub.f32 %v502, 1.0
        %v543 = vsub.f32 %v503, 1.0
        %v544 = vsub.f32 %v504, 1.0
        %v545 = vand.u32 2147483647, %v541
        %v546 = vand.u32 2147483647, %v542
        %v547 = vand.u32 2147483647, %v543
        %v548 = vand.u32 2147483647, %v544
        %v549 = vmul.f32 %v537, %v545
        %v550 = vmul.f32 %v538, %v546
        %v551 = vmul.f32 %v539, %v547
        %v552 = vmul.f32 %v540, %v548
        %v553 = vadd.f32 %v533, %v549
        %v554 = vadd.f32 %v534, %v550
        %v555 = vadd.f32 %v535, %v551
        %v556 = vadd.f32 %v536, %v552
        %v557 = vmul.f32 %v420, 0.00012207031
        %v558 = vmul.f32 %v421, 0.00012207031
        %v559 = vmul.f32 %v422, 0.00012207031
        %v560 = vmul.f32 %v423, 0.00012207031
        %v561 = vmul.f32 %v553, 0.00012254903
        %v562 = vmul.f32 %v554, 0.00012254903
        %v563 = vmul.f32 %v555, 0.00012254903
        %v564 = vmul.f32 %v556, 0.00012254903
        %v565 = vadd.f32 %v557, %v561
        %v566 = vadd.f32 %v558, %v562
        %v567 = vadd.f32 %v559, %v563
        %v568 = vadd.f32 %v560, %v564
        %v569 = vadd.f32 %v565, %v566
        %v570 = vadd.f32 %v569, %v567
        %v571 = vadd.f32 %v570, %v568
        %572 = vadd.xlane.f32.xlu0 %v571
        %v573 = vpop.xlane.xlu0 %572
        %v574 = vrot.slane %v573, 4
        %v575 = vadd.f32 %v573, %v574
        %v576 = vrot.slane %v575, 2
        %v577 = vadd.f32 %v575, %v576
        %v578 = vrot.slane %v577, 1
        %v579 = vadd.f32 %v577, %v578
        %s580 = vtos %v579
        %v581 = vlaneseq
        %v582 = vshrl.u32 %v581, 7
        %vm583 = vcmp.eq.s32.totalorder %v582, 0
        %vm584 = vcmp.eq.s32.totalorder %v388, 0
        %vm585 = vmand %vm583, %vm584
        %v586 = vsel %vm585, 1, 0
        %v587 = vcvt.s32.f32 %v586
        %v588 = vstv %s580
        %v589 = vmul.f32 %v587, %v588
        %590 = vst [vmem:[%s366] sm:$0xff] %v589
        %s591 = sand.u32 %s161, 1
        %s592 = scalar_lea.sflag [#allocation4], %s591
        %s593 = sand.u32 %s161, 1
        %s594 = smul.addr %s593, 8
        %s595 = scalar_lea.vmem [#allocation10], %s594
        // Predicated region
        $region53: #{tpu_custom_call.1} parent=35 // pred_check
          %p596 = pneg %p171
        $region54: #{tpu_custom_call.1} parent=35 // pred_check_branch
          %598 = sbr.rel (%p596) target = $region56
        $region55: #{tpu_custom_call.1} parent=35 // pred_region
          %s600 = ssub.s32 128, 128
          %601 = vsyncadd %s592, %s600
          %s602 = sadd.s32 %s32, %s31
          %s603 = smul.addr %s602, 128
          %s604 = scalar_lea.hbm %s4, %s603
          %s606 = sshll.u32 %s595, 4
          %s607 = int_to_ptr.vmem [resolvable:$true] %s606
          %609 = dma.vmem_to_hbm [thread:$0]  %s607, 128, %s604, %s592
        $region56: #{tpu_custom_call.1} parent=35 // pred_fallthru
          _
      $region36: #{tpu_custom_call.1} parent=5 // pred_fallthru
        _
      %p610 = scmp.le.s32.totalorder 2, %s22
      // Predicated region
      $region57: #{tpu_custom_call.1} parent=5 // pred_check
        %p611 = pneg %p610
      $region58: #{tpu_custom_call.1} parent=5 // pred_check_branch
        %613 = sbr.rel (%p611) target = $region60
      $region59: #{tpu_custom_call.1} parent=5 // pred_region
        %s614 = ssub.s32 %s22, 2
        // Predicated region
        $region61: #{tpu_custom_call.1} parent=59 // pred_check
          %p615 = pneg %p177
        $region62: #{tpu_custom_call.1} parent=59 // pred_check_branch
          %617 = sbr.rel (%p615) target = $region64
        $region63: #{tpu_custom_call.1} parent=59 // pred_region
          %s618 = sand.u32 %s162, 1
          %s619 = scalar_lea.sflag [#allocation4], %s618
          %s620 = sand.u32 %s162, 1
          %s621 = smul.addr %s620, 8
          %s622 = scalar_lea.vmem [#allocation10], %s621
          %623 = dma.done %s619, 128
        $region64: #{tpu_custom_call.1} parent=59 // pred_fallthru
          _
      $region60: #{tpu_custom_call.1} parent=5 // pred_fallthru
        _
    $region6: #{tpu_custom_call.1} parent=1 // loop_footer
      %s26 = sadd.s32 1, %s22
    $region7: #{tpu_custom_call.1} parent=1 // loop_footer_branch
      %21 = sbr.rel target = $region3
    $region8: #{tpu_custom_call.1} parent=1 // loop_exit
      _
    %624 = vsyncpa [#allocation3], 1
    %s625 = scalar_lea.sflag [#allocation3], 1
    %626 = vsyncpa %s625, 1
    %627 = vsyncpa [#allocation6], 1
    %s628 = scalar_lea.sflag [#allocation6], 1
    %629 = vsyncpa %s628, 1
    %630 = vsyncpa [#allocation9], 1
    %s631 = scalar_lea.sflag [#allocation9], 1
    %632 = vsyncpa %s631, 1
    %633 = vsyncpa [#allocation4], 1
    %s634 = scalar_lea.sflag [#allocation4], 1
    %635 = vsyncpa %s634, 1

</llo_original>
